<compile_context>
chip_gen: v5e
topology: v5e:2x2
jax: 0.10.0
libtpu: 0.0.40
codegen_flags: <defaults>
</compile_context>

<pallas_src>
import functools

import jax
import jax.numpy as jnp
from jax.experimental import pallas as pl
from jax.experimental.pallas import tpu as pltpu


@functools.lru_cache(maxsize=None)
def _roll_is_numpy_convention() -> bool:
    """Resolve pltpu.roll's direction once on the real backend.

    True  => pltpu.roll(x, s, axis)[i] == x[(i - s) % n]   (np.roll convention)
    False => pltpu.roll(x, s, axis)[i] == x[(i + s) % n]
    The main kernel derives its static shift amounts from this, so the dx/dy
    boundary masks are exact regardless of the convention.
    """
    def probe(x_ref, o_ref):
        o_ref[...] = pltpu.roll(x_ref[...], 1, axis=1)

    with jax.ensure_compile_time_eval():
        x = jax.lax.broadcasted_iota(jnp.int32, (8, 128), 1)
        out = pl.pallas_call(
            probe, out_shape=jax.ShapeDtypeStruct((8, 128), jnp.int32)
        )(x)
        return int(out[0, 1]) == 0


def _vmem_capacity_bytes() -> int:
    try:
        return int(pltpu.get_tpu_info().vmem_capacity_bytes)
    except Exception:
        return 64 * 1024 * 1024          # conservative (v7x per-TC figure)


def _num_tensorcores() -> int:
    """TensorCores reachable from one pallas_call (megacore / v7x: 2)."""
    try:
        kind = jax.devices()[0].device_kind.lower()
    except Exception:
        return 1
    return 2 if any(tag in kind for tag in ("v7", "v4", "v5p")) else 1


def _edge_loss_kernel(scale_x_ref, scale_y_ref, pred_ref, target_ref, out_ref,
                      acc_ref, *, shift_x, shift_y, total_blocks, tb, rows,
                      ragged):
    """Grid = (cores, blocks_per_core); each block is a (tb, H*W) slab.

    acc_ref: single merged (tb, H*W) f32 VMEM accumulator.  Boundary masks and
    the two 1/n factors are pre-folded into the (1, H*W) scale rows, so each
    step is one element-wise update; the single cross-lane/sublane reduce and
    the output store happen once, in the last step of each core.
    """
    c = pl.program_id(0)
    i = pl.program_id(1)
    n_i = pl.num_programs(1)
    blk = c * n_i + i                          # global block index

    @pl.when(i == 0)
    def _init():
        acc_ref[...] = jnp.zeros_like(acc_ref)

    @pl.when(blk < total_blocks)               # skip phantom (clamped) blocks
    def _accumulate():
        p = pred_ref[...]
        t = target_ref[...]
        if p.dtype != jnp.float32:
            p = p.astype(jnp.float32)
            t = t.astype(jnp.float32)
        d = p - t                              # (tb, H*W) f32

        # Right / below neighbours via lane rotation (XLU slot, ~free).
        d_nx = pltpu.roll(d, shift_x, axis=1)  # d_nx[r, q] == d[r, q + 1]
        d_ny = pltpu.roll(d, shift_y, axis=1)  # d_ny[r, q] == d[r, q + w]

        contrib = (scale_x_ref[...] * jnp.abs(d_nx - d)
                   + scale_y_ref[...] * jnp.abs(d_ny - d))

        if ragged:
            # Only the last real block has padded rows; neutralize them with a
            # select (NOT a multiply: stale pad data may be NaN/Inf).
            @pl.when(blk == total_blocks - 1)
            def _tail():
                row = jax.lax.broadcasted_iota(jnp.int32, contrib.shape, 0)
                valid = (blk * tb + row) < rows
                acc_ref[...] += jnp.where(valid, contrib, 0.0)

            @pl.when(blk != total_blocks - 1)
            def _full():
                acc_ref[...] += contrib
        else:
            acc_ref[...] += contrib

    @pl.when(i == n_i - 1)
    def _finalize():
        out_ref[...] = jnp.full(out_ref.shape, jnp.sum(acc_ref[...]),
                                out_ref.dtype)


def edge_loss(pred, target, *, block_rows=None, force_cores=None):
    """EdgeLoss forward.  pred/target: (N, C, H, W) arrays.  Returns scalar f32."""
    assert pred.shape == target.shape, (pred.shape, target.shape)
    assert pred.dtype == target.dtype, (pred.dtype, target.dtype)
    n, ch, h, w = pred.shape
    m = n * ch
    hw = h * w

    # Free (contiguous) reshape: lane axis becomes H*W; one block = tb images.
    p2 = pred.reshape(m, hw)
    t2 = target.reshape(m, hw)
    # TODO(synk): if H*W is not a multiple of 128 (e.g. 14x14), every row pads
    # to the next 128 lanes; such shapes would prefer a padded (N*C*H, W) layout.

    itemsize = jnp.dtype(pred.dtype).itemsize
    sub_mult = 8 * max(1, 4 // itemsize)       # 8 (f32), 16 (bf16), 32 (int8)

    # Generation-aware block sizing.  Peak VMEM ~= 2 inputs x 2 buffers x block
    # + 1 f32 accumulator block (<= 5x the f32-equivalent block size).
    vmem_cap = _vmem_capacity_bytes()
    if vmem_cap >= 96 * 1024 * 1024:           # v5e / v6e: 128 MiB physical
        target_block_bytes, vmem_limit = 8 << 20, 64 << 20
    else:                                      # v7x-class: 64 MiB physical
        target_block_bytes, vmem_limit = 4 << 20, 40 << 20

    if block_rows is None:
        tb = max(1, target_block_bytes // (hw * 4))
    else:
        tb = int(block_rows)
    if tb >= m:
        tb = m
    else:
        tb = max(sub_mult, (tb // sub_mult) * sub_mult)
        tb = min(tb, m)
    # TODO(synk): very large single images (hw*4 bytes >> block budget) would
    # need an extra H*W-axis tiling with a one-row halo for dy.
    total_blocks = pl.cdiv(m, tb)
    ragged = (total_blocks * tb) != m

    num_tc = _num_tensorcores() if force_cores is None else int(force_cores)
    ncores = 2 if (num_tc >= 2 and total_blocks >= 2) else 1
    nbc = pl.cdiv(total_blocks, ncores)        # blocks per core

    if ncores * nbc == total_blocks:
        def in_idx(c, i):
            return (c * nbc + i, 0)
    else:
        last_blk = total_blocks - 1            # clamp phantom blocks

        def in_idx(c, i):
            return (jnp.minimum(c * nbc + i, last_blk), 0)

    # Fold the finite-difference boundary masks and the 1/n L1 scaling into two
    # per-lane scale rows, computed once on the host and streamed once.
    n_dx = m * h * (w - 1)
    n_dy = m * (h - 1) * w
    inv_dx = (1.0 / n_dx) if n_dx > 0 else 0.0   # degenerate W==1 / H==1 -> 0
    inv_dy = (1.0 / n_dy) if n_dy > 0 else 0.0
    col = jnp.arange(hw, dtype=jnp.int32)
    scale_x = jnp.where((col % w) != (w - 1), inv_dx, 0.0).astype(jnp.float32)
    scale_y = jnp.where(col < (h - 1) * w, inv_dy, 0.0).astype(jnp.float32)
    scale_x = scale_x.reshape(1, hw)
    scale_y = scale_y.reshape(1, hw)

    np_conv = _roll_is_numpy_convention()
    shift_x = (hw - 1) if np_conv else 1         # "element q+1" shift
    shift_y = (hw - w) if np_conv else w         # "element q+w" shift

    kernel = functools.partial(
        _edge_loss_kernel,
        shift_x=shift_x, shift_y=shift_y,
        total_blocks=total_blocks, tb=tb, rows=m, ragged=ragged,
    )

    partials = pl.pallas_call(
        kernel,
        out_shape=jax.ShapeDtypeStruct((ncores, 8, 128), jnp.float32),
        grid_spec=pltpu.PrefetchScalarGridSpec(
            num_scalar_prefetch=0,
            grid=(ncores, nbc),
            in_specs=[
                pl.BlockSpec((1, hw), lambda c, i: (0, 0)),   # scale_x row
                pl.BlockSpec((1, hw), lambda c, i: (0, 0)),   # scale_y row
                pl.BlockSpec((tb, hw), in_idx),
                pl.BlockSpec((tb, hw), in_idx),
            ],
            out_specs=pl.BlockSpec((1, 8, 128), lambda c, i: (c, 0, 0)),
            scratch_shapes=[pltpu.VMEM((tb, hw), jnp.float32)],
        ),
        compiler_params=pltpu.CompilerParams(
            # TODO(synk): on v7x confirm with xprof that "parallel" shards the
            # leading axis across both TensorCores; otherwise switch to
            # CORE_PARALLEL / pl.core_map, keeping the per-core output slabs.
            dimension_semantics=("parallel", "arbitrary"),
            vmem_limit_bytes=vmem_limit,
        ),
    )(scale_x, scale_y, p2, t2)

    # Each core's scaled partial is replicated across its (8, 128) slab.
    return partials[:, 0, 0].sum()


def _edge_loss_ref(pred, target):
    """Pure-JAX reference matching the PyTorch module exactly."""
    pred_dx = pred[:, :, :, 1:] - pred[:, :, :, :-1]
    pred_dy = pred[:, :, 1:, :] - pred[:, :, :-1, :]
    target_dx = target[:, :, :, 1:] - target[:, :, :, :-1]
    target_dy = target[:, :, 1:, :] - target[:, :, :-1, :]
    loss_x = jnp.mean(jnp.abs(pred_dx - target_dx))
    loss_y = jnp.mean(jnp.abs(pred_dy - target_dy))
    return loss_x + loss_y


if __name__ == "__main__":
    key = jax.random.PRNGKey(0)
    k1, k2, k3, k4, k5, k6, k7, k8 = jax.random.split(key, 8)

    # Case 1: the module's nominal small shape, single block.
    pred = jax.random.normal(k1, (2, 4, 16, 16), dtype=jnp.float32)
    target = jax.random.normal(k2, (2, 4, 16, 16), dtype=jnp.float32)
    loss = jax.block_until_ready(edge_loss(pred, target))
    ref = jax.block_until_ready(_edge_loss_ref(pred, target))
    assert jnp.allclose(loss, ref, rtol=1e-5, atol=1e-5), (loss, ref)

    # Case 2: multiple blocks with a ragged last block (masked tail path).
    pred2 = jax.random.normal(k3, (3, 5, 16, 16), dtype=jnp.float32)
    target2 = jax.random.normal(k4, (3, 5, 16, 16), dtype=jnp.float32)
    loss2 = jax.block_until_ready(edge_loss(pred2, target2, block_rows=8))
    ref2 = jax.block_until_ready(_edge_loss_ref(pred2, target2))
    assert jnp.allclose(loss2, ref2, rtol=1e-5, atol=1e-5), (loss2, ref2)

    # Case 3: 2-way core split with an odd block count (phantom-block skip +
    # per-core partial sum); runs sequentially & correctly on 1-TC chips too.
    pred3 = jax.random.normal(k5, (3, 8, 16, 16), dtype=jnp.float32)
    target3 = jax.random.normal(k6, (3, 8, 16, 16), dtype=jnp.float32)
    loss3 = jax.block_until_ready(
        edge_loss(pred3, target3, block_rows=8, force_cores=2))
    ref3 = jax.block_until_ready(_edge_loss_ref(pred3, target3))
    assert jnp.allclose(loss3, ref3, rtol=1e-5, atol=1e-5), (loss3, ref3)

    # Case 4: bf16 inputs stream as bf16; math is f32 inside the kernel.
    pred4 = jax.random.normal(k7, (2, 8, 16, 16), dtype=jnp.bfloat16)
    target4 = jax.random.normal(k8, (2, 8, 16, 16), dtype=jnp.bfloat16)
    loss4 = jax.block_until_ready(edge_loss(pred4, target4))
    ref4 = jax.block_until_ready(_edge_loss_ref(pred4.astype(jnp.float32),
                                                target4.astype(jnp.float32)))
    assert jnp.allclose(loss4, ref4, rtol=1e-3, atol=1e-3), (loss4, ref4)

    print("KERNEL_OK")
</pallas_src>

<mosaic_0001>
module attributes {stable_mosaic.version = 11 : i64} {
  func.func @probe(%arg0: memref<8x128xi32, #tpu.memory_space<vmem>>, %arg1: memref<8x128xi32, #tpu.memory_space<vmem>>) attributes {dimension_semantics = [], scalar_prefetch = 0 : i64, scratch_operands = 0 : i64, tpu.core_type = #tpu.core_type<tc>} {
    %c0 = arith.constant 0 : index
    %c0_0 = arith.constant 0 : index
    %0 = vector.load %arg0[%c0, %c0_0] : memref<8x128xi32, #tpu.memory_space<vmem>>, vector<8x128xi32>
    %c1_i32 = arith.constant 1 : i32
    %1 = tpu.dynamic_rotate %0 by %c1_i32 dim 1 : vector<8x128xi32>, i32 -> vector<8x128xi32>
    %c0_1 = arith.constant 0 : index
    %c0_2 = arith.constant 0 : index
    %2 = vector.load %arg1[%c0_1, %c0_2] : memref<8x128xi32, #tpu.memory_space<vmem>>, vector<8x128xi32>
    tpu.vector_store %arg1[%c0_1, %c0_2], %1 {strides = array<i32>} : memref<8x128xi32, #tpu.memory_space<vmem>>, vector<8x128xi32>,
    return
  }
}

</mosaic_0001>

<llo_original>
// kernel: tpu_custom_call.1
$region0: #{tpu_custom_call.1}
  #allocation0 [shape = 'u32[]', space=smem, size = 0x4, offset = 0x4, fixed_abs, tag = 'smem constant byte address 0x4 - core index']
  #allocation1 [shape = 'u32[72,128]{1,0:T(1,128)}', space=vmem, size = 0x9000, scoped, tag = 'internal scratch']
  %s0 = inlined_call_operand.hbm [shape: s32[8,128], index: 0, kind: input, shape index: {}]
  %s1 = inlined_call_operand.hbm [shape: s32[8,128], index: 1, kind: output, shape index: {}]
  %s2 = sld [smem:[#allocation0]]
  $region18: #{tpu_custom_call.1} parent=0
    _
  %s4 = ssub.s32 1, %s2
  %s5 = scalar_select 0, %s4, %s2
  $region1: #{tpu_custom_call.1} parent=0
    #allocation2 [shape = 'u8[4096]{0}', space=vmem, size = 0x1000, scoped, tag = 'input window, operand 0, single buffered']
    #allocation3 [shape = 's32[1]{0}', space=sflag, size = 0x4, scoped, tag = 'scoped memory for tpu_custom_call.1']
    #allocation4 [shape = 's32[1]{0}', space=sflag, size = 0x4, scoped, tag = 'scoped memory for tpu_custom_call.1']
    #allocation5 [shape = 'u8[4096]{0}', space=vmem, size = 0x1000, scoped, tag = 'output window, operand 0, single buffered']
    %6 = vsyncpa [#allocation3], 0
    %7 = vsyncpa [#allocation4], 0
    // Predicated region
    $region2: #{tpu_custom_call.1} parent=1 // pred_check
      _
    $region3: #{tpu_custom_call.1} parent=1 // pred_check_branch
      %9 = sbr.rel (0) target = $region5
    $region4: #{tpu_custom_call.1} parent=1 // pred_region
      %11 = vsyncadd [#allocation3], 0
      %s13 = sshll.u32 %s0, 4
      %s14 = int_to_ptr.hbm [resolvable:$true] %s13
      %s15 = sshll.u32 [#allocation2], 4
      %s16 = int_to_ptr.vmem [resolvable:$true] %s15
      %18 = dma.hbm_to_vmem [thread:$0]  %s14, 128, %s16, [#allocation3]
    $region5: #{tpu_custom_call.1} parent=1 // pred_fallthru
      _
    // Predicated region
    $region6: #{tpu_custom_call.1} parent=1 // pred_check
      _
    $region7: #{tpu_custom_call.1} parent=1 // pred_check_branch
      %20 = sbr.rel (0) target = $region9
    $region8: #{tpu_custom_call.1} parent=1 // pred_region
      %22 = dma.done [#allocation3], 128
    $region9: #{tpu_custom_call.1} parent=1 // pred_fallthru
      _
    %v23 = vld [vmem:[#allocation2] sm:$0xff]
    %24 = vrot.lane.b32.xlu0 %v23, 1
    %v25 = vpop.permute.xlu0 %24
    %26 = vst [vmem:[#allocation5] sm:$0xff] %v25
    // Predicated region
    $region10: #{tpu_custom_call.1} parent=1 // pred_check
      _
    $region11: #{tpu_custom_call.1} parent=1 // pred_check_branch
      %28 = sbr.rel (0) target = $region13
    $region12: #{tpu_custom_call.1} parent=1 // pred_region
      %30 = vsyncadd [#allocation4], 0
      %s32 = sshll.u32 [#allocation5], 4
      %s33 = int_to_ptr.vmem [resolvable:$true] %s32
      %s34 = sshll.u32 %s1, 4
      %s35 = int_to_ptr.hbm [resolvable:$true] %s34
      %37 = dma.vmem_to_hbm [thread:$0]  %s33, 128, %s35, [#allocation4]
    $region13: #{tpu_custom_call.1} parent=1 // pred_fallthru
      _
    // Predicated region
    $region14: #{tpu_custom_call.1} parent=1 // pred_check
      _
    $region15: #{tpu_custom_call.1} parent=1 // pred_check_branch
      %39 = sbr.rel (0) target = $region17
    $region16: #{tpu_custom_call.1} parent=1 // pred_region
      %41 = dma.done [#allocation4], 128
    $region17: #{tpu_custom_call.1} parent=1 // pred_fallthru
      _
    %42 = vsyncpa [#allocation3], 1
    %43 = vsyncpa [#allocation4], 1

</llo_original>
